<compile_context>
chip_gen: v5e
topology: v5e:2x2
jax: 0.10.0
libtpu: 0.0.40
codegen_flags: <defaults>
</compile_context>

<pallas_src>
import functools

import jax
import jax.numpy as jnp
import numpy as np
from jax.experimental import pallas as pl
from jax.experimental.pallas import tpu as pltpu

OUT_LANES = 128  # combined lane-dense output width: [h_new (H) | y_hat (O) | zero pad]


# ----------------------------------------------------------------------------
# Shared GRU-cell math (used by the Pallas kernels AND the matched reference).
# ----------------------------------------------------------------------------
def _gru_step(x, h, w_gc, w_head, H):
    """One GRU-cell step.

    x      : (B, I)              f32
    h      : (B, H)              f32
    w_gc   : (I+H+1, 3H)         bf16  rows = [Wx_* ; Wh_* ; bx_*], cols = [z | r | cand]
    w_head : (H+1, OUT_LANES-H)  bf16  rows = [Wy ; by], zero-padded columns
    returns (h_new (B, H) f32, out_slab (B, OUT_LANES) f32 = [h_new | y_pad])
    """
    B = x.shape[0]
    ones = jnp.ones((B, 1), jnp.float32)
    mm_dtype = w_gc.dtype

    # z/r gates: one fused MXU matmul over the concatenated operand.
    zr_in = jnp.concatenate([x, h, ones], axis=1).astype(mm_dtype)            # (B, I+H+1)
    zr = jnp.dot(zr_in, w_gc[:, : 2 * H], preferred_element_type=jnp.float32)  # (B, 2H)
    z = jax.nn.sigmoid(zr[:, :H])
    r = jax.nn.sigmoid(zr[:, H: 2 * H])

    # candidate: consumes r*h, so it is its own matmul.
    c_in = jnp.concatenate([x, r * h, ones], axis=1).astype(mm_dtype)         # (B, I+H+1)
    cand = jnp.tanh(jnp.dot(c_in, w_gc[:, 2 * H:], preferred_element_type=jnp.float32))

    h_new = z * h + (1.0 - z) * cand                                          # f32 gating

    # output head, padded to OUT_LANES - H so the combined output slab is lane-dense.
    y_in = jnp.concatenate([h_new, ones], axis=1).astype(mm_dtype)            # (B, H+1)
    y_pad = jnp.dot(y_in, w_head, preferred_element_type=jnp.float32)         # (B, OUT_LANES-H)

    return h_new, jnp.concatenate([h_new, y_pad], axis=1)                     # (B, OUT_LANES)


# ----------------------------------------------------------------------------
# Kernels
# ----------------------------------------------------------------------------
def gru_step_kernel(x_ref, h_ref, wgc_ref, whead_ref, out_ref):
    """Single GRU_classifier.forward step (one pallas_call, everything in VMEM)."""
    B = x_ref.shape[0]
    H = h_ref.shape[-1]
    # torch keeps one shared (H,) hidden state; broadcast it over the batch rows.
    h = jnp.broadcast_to(h_ref[...], (B, H))
    _, out_slab = _gru_step(x_ref[...], h, wgc_ref[...], whead_ref[...], H)
    out_ref[...] = out_slab


def gru_seq_kernel(x_ref, h0_ref, wgc_ref, whead_ref, out_ref, h_scr):
    """T forward steps with the recurrence carried in a VMEM scratch accumulator."""
    H = h_scr.shape[-1]

    @pl.when(pl.program_id(0) == 0)
    def _():
        h_scr[...] = jnp.broadcast_to(h0_ref[...], h_scr.shape)

    h_new, out_slab = _gru_step(x_ref[0], h_scr[...], wgc_ref[...], whead_ref[...], H)
    h_scr[...] = h_new
    out_ref[0] = out_slab


# ----------------------------------------------------------------------------
# Wrappers
# ----------------------------------------------------------------------------
def pack_params(p, mm_dtype=jnp.bfloat16):
    """Pack the 11 torch tensors into two MXU-ready slabs (bias folded as last row)."""
    I, H = p["Wx_z"].shape
    O = p["Wy"].shape[1]
    assert H + O <= OUT_LANES, "packed output layout assumes h_size + out_size <= 128"

    w_gc = jnp.zeros((I + H + 1, 3 * H), jnp.float32)
    for g, (wx, wh, bx) in enumerate((("Wx_z", "Wh_z", "bx_z"),
                                      ("Wx_r", "Wh_r", "bx_r"),
                                      ("Wx_h", "Wh_h", "bx_h"))):
        col = slice(g * H, (g + 1) * H)
        w_gc = w_gc.at[:I, col].set(p[wx])
        w_gc = w_gc.at[I:I + H, col].set(p[wh])
        w_gc = w_gc.at[I + H, col].set(p[bx])

    w_head = jnp.zeros((H + 1, OUT_LANES - H), jnp.float32)
    w_head = w_head.at[:H, :O].set(p["Wy"])
    w_head = w_head.at[H, :O].set(p["by"])
    return w_gc.astype(mm_dtype), w_head.astype(mm_dtype)


@functools.partial(jax.jit, static_argnames=("out_size",))
def gru_classifier_forward(x, h, w_gc, w_head, *, out_size):
    """One GRU_classifier.forward step. Returns (y_hat (B, O), h_new (B, H))."""
    B, _ = x.shape
    H = h.shape[-1]
    vmem = pl.BlockSpec(memory_space=pltpu.VMEM)
    out = pl.pallas_call(
        gru_step_kernel,
        out_shape=jax.ShapeDtypeStruct((B, OUT_LANES), jnp.float32),
        in_specs=[vmem, vmem, vmem, vmem],
        out_specs=vmem,
    )(x, h.reshape(1, H), w_gc, w_head)
    return out[:, H:H + out_size], out[:, :H]


@functools.partial(jax.jit, static_argnames=("out_size",))
def gru_classifier_forward_seq(x_seq, h0, w_gc, w_head, *, out_size):
    """Apply the cell over a (T, B, I) sequence with the time loop inside the kernel.

    Weights stay VMEM-resident across steps (constant index_map); the hidden state is
    carried in a VMEM scratch accumulator. Returns (y_seq (T, B, O), h_last (B, H)).
    """
    T, B, I = x_seq.shape
    H = h0.shape[-1]
    grid_spec = pltpu.PrefetchScalarGridSpec(
        num_scalar_prefetch=0,
        grid=(T,),
        in_specs=[
            pl.BlockSpec((1, B, I), lambda t: (t, 0, 0)),    # x_t streamed per step
            pl.BlockSpec((1, H), lambda t: (0, 0)),          # h0 (read at t == 0)
            pl.BlockSpec(w_gc.shape, lambda t: (0, 0)),      # weights resident
            pl.BlockSpec(w_head.shape, lambda t: (0, 0)),
        ],
        out_specs=pl.BlockSpec((1, B, OUT_LANES), lambda t: (t, 0, 0)),
        scratch_shapes=[pltpu.VMEM((B, H), jnp.float32)],    # carried hidden state
    )
    out = pl.pallas_call(
        gru_seq_kernel,
        out_shape=jax.ShapeDtypeStruct((T, B, OUT_LANES), jnp.float32),
        grid_spec=grid_spec,
        # Recurrence over t => "arbitrary". A batch-tile grid axis (if B were scaled
        # up) would be marked "parallel" to shard across v7x's two TensorCores.
        compiler_params=pltpu.CompilerParams(dimension_semantics=("arbitrary",)),
    )(x_seq, h0.reshape(1, H), w_gc, w_head)
    return out[:, :, H:H + out_size], out[-1, :, :H]


# ----------------------------------------------------------------------------
# Parameters & references
# ----------------------------------------------------------------------------
def init_params(key, input_size, h_size, out_size):
    """Deterministic synthetic parameters; weights stored as (in_dim, out_dim),
    i.e. already transposed relative to torch nn.Linear's (out, in)."""
    ks = jax.random.split(key, 11)
    n = lambda k, shp: 0.1 * jax.random.normal(k, shp, jnp.float32)
    return {
        "Wx_z": n(ks[0], (input_size, h_size)), "bx_z": n(ks[1], (h_size,)),
        "Wx_r": n(ks[2], (input_size, h_size)), "bx_r": n(ks[3], (h_size,)),
        "Wx_h": n(ks[4], (input_size, h_size)), "bx_h": n(ks[5], (h_size,)),
        "Wh_z": n(ks[6], (h_size, h_size)),
        "Wh_r": n(ks[7], (h_size, h_size)),
        "Wh_h": n(ks[8], (h_size, h_size)),
        "Wy": n(ks[9], (h_size, out_size)), "by": n(ks[10], (out_size,)),
    }


def reference_forward_f32(x, h, p):
    """Pure-f32 JAX reference matching the PyTorch forward."""
    zt = jax.nn.sigmoid(x @ p["Wx_z"] + p["bx_z"] + h @ p["Wh_z"])
    rt = jax.nn.sigmoid(x @ p["Wx_r"] + p["bx_r"] + h @ p["Wh_r"])
    cand = jnp.tanh(x @ p["Wx_h"] + p["bx_h"] + (rt * h) @ p["Wh_h"])
    h_new = zt * h + (1.0 - zt) * cand
    return h_new @ p["Wy"] + p["by"], h_new


def packed_reference_step(x, h, w_gc, w_head, H, O):
    """Matched-precision (bf16-matmul) reference using the same packed slabs."""
    h_new, out_slab = _gru_step(x, h, w_gc, w_head, H)
    return out_slab[:, H:H + O], h_new


# ----------------------------------------------------------------------------
if __name__ == "__main__":
    key = jax.random.PRNGKey(0)
    k_x, k_p, k_s = jax.random.split(key, 3)

    batch, input_size, h_size, out_size, seq_len = 2, 16, 32, 2, 8

    x = jax.random.normal(k_x, (batch, input_size), jnp.float32)
    h0 = jnp.zeros((h_size,), jnp.float32)  # module __init__: self.hidden = torch.zeros(h_size)
    params = init_params(k_p, input_size, h_size, out_size)
    w_gc, w_head = pack_params(params)

    # ---- single step (exactly GRU_classifier.forward) ----
    y_hat, h_new = gru_classifier_forward(x, h0, w_gc, w_head, out_size=out_size)
    y_hat, h_new = jax.block_until_ready((y_hat, h_new))

    hb0 = jnp.broadcast_to(h0.reshape(1, h_size), (batch, h_size))
    y_m, h_m = packed_reference_step(x, hb0, w_gc, w_head, h_size, out_size)
    assert np.allclose(np.asarray(y_hat), np.asarray(y_m), atol=1e-3), "y_hat vs matched ref"
    assert np.allclose(np.asarray(h_new), np.asarray(h_m), atol=1e-3), "h_new vs matched ref"

    y_f32, h_f32 = reference_forward_f32(x, h0.reshape(1, h_size), params)
    assert np.allclose(np.asarray(y_hat), np.asarray(y_f32), atol=5e-2), "y_hat vs f32 ref"
    assert np.allclose(np.asarray(h_new), np.asarray(h_f32), atol=5e-2), "h_new vs f32 ref"

    # ---- sequence: time loop inside the kernel, weights VMEM-resident ----
    x_seq = jax.random.normal(k_s, (seq_len, batch, input_size), jnp.float32)
    y_seq, h_last = gru_classifier_forward_seq(x_seq, h0, w_gc, w_head, out_size=out_size)
    y_seq, h_last = jax.block_until_ready((y_seq, h_last))

    h_ref = hb0
    y_ref_steps = []
    for t in range(seq_len):
        y_t, h_ref = packed_reference_step(x_seq[t], h_ref, w_gc, w_head, h_size, out_size)
        y_ref_steps.append(y_t)
    y_seq_ref = jnp.stack(y_ref_steps)
    assert np.allclose(np.asarray(y_seq), np.asarray(y_seq_ref), atol=2e-3), "seq y mismatch"
    assert np.allclose(np.asarray(h_last), np.asarray(h_ref), atol=2e-3), "seq hidden mismatch"

    print("KERNEL_OK")
</pallas_src>

<mosaic_0001>
module attributes {stable_mosaic.version = 11 : i64} {
  func.func @gru_step_kernel(%arg0: memref<2x16xf32, #tpu.memory_space<vmem>>, %arg1: memref<1x32xf32, #tpu.memory_space<vmem>>, %arg2: memref<49x96xbf16, #tpu.memory_space<vmem>>, %arg3: memref<33x96xbf16, #tpu.memory_space<vmem>>, %arg4: memref<2x128xf32, #tpu.memory_space<vmem>>) attributes {dimension_semantics = [], scalar_prefetch = 0 : i64, scratch_operands = 0 : i64, tpu.core_type = #tpu.core_type<tc>} {
    %c0 = arith.constant 0 : index
    %c0_0 = arith.constant 0 : index
    %0 = vector.load %arg1[%c0, %c0_0] : memref<1x32xf32, #tpu.memory_space<vmem>>, vector<1x32xf32>
    %1 = vector.shape_cast %0 : vector<1x32xf32> to vector<1x32xf32>
    %2 = vector.broadcast %1 : vector<1x32xf32> to vector<2x32xf32>
    %c0_1 = arith.constant 0 : index
    %c0_2 = arith.constant 0 : index
    %3 = vector.load %arg0[%c0_1, %c0_2] : memref<2x16xf32, #tpu.memory_space<vmem>>, vector<2x16xf32>
    %c0_3 = arith.constant 0 : index
    %c0_4 = arith.constant 0 : index
    %4 = vector.load %arg2[%c0_3, %c0_4] : memref<49x96xbf16, #tpu.memory_space<vmem>>, vector<49x96xbf16>
    %c0_5 = arith.constant 0 : index
    %c0_6 = arith.constant 0 : index
    %5 = vector.load %arg3[%c0_5, %c0_6] : memref<33x96xbf16, #tpu.memory_space<vmem>>, vector<33x96xbf16>
    %cst = arith.constant 1.000000e+00 : f32
    %6 = vector.broadcast %cst : f32 to vector<2x1xf32>
    %7 = tpu.concatenate %3, %2, %6 in 1 : vector<2x16xf32>, vector<2x32xf32>, vector<2x1xf32> -> vector<2x49xf32>
    %8 = arith.truncf %7 : vector<2x49xf32> to vector<2x49xbf16>
    %9 = vector.extract_strided_slice %4 {offsets = [0, 0], sizes = [49, 64], strides = [1, 1]} : vector<49x96xbf16> to vector<49x64xbf16>
    %cst_7 = arith.constant dense<0.000000e+00> : vector<2x64xf32>
    %10 = tpu.matmul %8, %9, %cst_7 {dimension_numbers = #tpu.dot_dimension_numbers<[1], [0], [0], [1], [0, 0, 1, 1], [], []>} : vector<2x49xbf16>, vector<49x64xbf16>, vector<2x64xf32> -> vector<2x64xf32>
    %11 = vector.extract_strided_slice %10 {offsets = [0, 0], sizes = [2, 32], strides = [1, 1]} : vector<2x64xf32> to vector<2x32xf32>
    %12 = arith.negf %11 : vector<2x32xf32>
    %13 = math.exp %12 : vector<2x32xf32>
    %cst_8 = arith.constant 1.000000e+00 : f32
    %14 = vector.broadcast %cst_8 : f32 to vector<2x32xf32>
    %15 = arith.addf %14, %13 : vector<2x32xf32>
    %16 = arith.divf %14, %15 : vector<2x32xf32>
    %17 = vector.extract_strided_slice %10 {offsets = [0, 32], sizes = [2, 32], strides = [1, 1]} : vector<2x64xf32> to vector<2x32xf32>
    %18 = arith.negf %17 : vector<2x32xf32>
    %19 = math.exp %18 : vector<2x32xf32>
    %cst_9 = arith.constant 1.000000e+00 : f32
    %20 = vector.broadcast %cst_9 : f32 to vector<2x32xf32>
    %21 = arith.addf %20, %19 : vector<2x32xf32>
    %22 = arith.divf %20, %21 : vector<2x32xf32>
    %23 = arith.mulf %22, %2 : vector<2x32xf32>
    %24 = tpu.concatenate %3, %23, %6 in 1 : vector<2x16xf32>, vector<2x32xf32>, vector<2x1xf32> -> vector<2x49xf32>
    %25 = arith.truncf %24 : vector<2x49xf32> to vector<2x49xbf16>
    %26 = vector.extract_strided_slice %4 {offsets = [0, 64], sizes = [49, 32], strides = [1, 1]} : vector<49x96xbf16> to vector<49x32xbf16>
    %cst_10 = arith.constant dense<0.000000e+00> : vector<2x32xf32>
    %27 = tpu.matmul %25, %26, %cst_10 {dimension_numbers = #tpu.dot_dimension_numbers<[1], [0], [0], [1], [0, 0, 1, 1], [], []>} : vector<2x49xbf16>, vector<49x32xbf16>, vector<2x32xf32> -> vector<2x32xf32>
    %28 = math.tanh %27 : vector<2x32xf32>
    %29 = arith.mulf %16, %2 : vector<2x32xf32>
    %cst_11 = arith.constant 1.000000e+00 : f32
    %30 = vector.broadcast %cst_11 : f32 to vector<2x32xf32>
    %31 = arith.subf %30, %16 : vector<2x32xf32>
    %32 = arith.mulf %31, %28 : vector<2x32xf32>
    %33 = arith.addf %29, %32 : vector<2x32xf32>
    %34 = tpu.concatenate %33, %6 in 1 : vector<2x32xf32>, vector<2x1xf32> -> vector<2x33xf32>
    %35 = arith.truncf %34 : vector<2x33xf32> to vector<2x33xbf16>
    %cst_12 = arith.constant dense<0.000000e+00> : vector<2x96xf32>
    %36 = tpu.matmul %35, %5, %cst_12 {dimension_numbers = #tpu.dot_dimension_numbers<[1], [0], [0], [1], [0, 0, 1, 1], [], []>} : vector<2x33xbf16>, vector<33x96xbf16>, vector<2x96xf32> -> vector<2x96xf32>
    %37 = tpu.concatenate %33, %36 in 1 : vector<2x32xf32>, vector<2x96xf32> -> vector<2x128xf32>
    %c0_13 = arith.constant 0 : index
    %c0_14 = arith.constant 0 : index
    %38 = vector.load %arg4[%c0_13, %c0_14] : memref<2x128xf32, #tpu.memory_space<vmem>>, vector<2x128xf32>
    tpu.vector_store %arg4[%c0_13, %c0_14], %37 {strides = array<i32>} : memref<2x128xf32, #tpu.memory_space<vmem>>, vector<2x128xf32>,
    return
  }
}

</mosaic_0001>

<llo_original>
// kernel: gru_classifier_forward.1
$region0: #{gru_classifier_forward.1}
  #allocation0 [shape = 'u32[]', space=smem, size = 0x4, offset = 0x4, fixed_abs, tag = 'smem constant byte address 0x4 - core index']
  #allocation1 [shape = 'u32[72,128]{1,0:T(1,128)}', space=vmem, size = 0x9000, scoped, tag = 'internal scratch']
  %s0 = inlined_call_operand.hbm [shape: f32[2,16], index: 0, kind: input, shape index: {}]
  %s1 = inlined_call_operand.vmem [shape: f32[1,32], index: 1, kind: input, shape index: {}]
  %s2 = inlined_call_operand.hbm [shape: bf16[49,96], index: 2, kind: input, shape index: {}]
  %s3 = inlined_call_operand.hbm [shape: bf16[33,96], index: 3, kind: input, shape index: {}]
  %s4 = inlined_call_operand.vmem [shape: f32[2,128], index: 4, kind: output, shape index: {}]
  %s5 = sld [smem:[#allocation0]]
  $region38: #{gru_classifier_forward.1} parent=0
    _
  %s7 = ssub.s32 1, %s5
  %s8 = scalar_select 0, %s7, %s5
  $region1: #{gru_classifier_forward.1} parent=0
    #allocation2 [shape = 'u8[1024]{0}', space=vmem, size = 0x400, scoped, tag = 'input window, operand 0, single buffered']
    #allocation3 [shape = 's32[1]{0}', space=sflag, size = 0x4, scoped, tag = 'scoped memory for gru_classifier_forward.1']
    #allocation4 [shape = 'u8[14336]{0}', space=vmem, size = 0x3800, scoped, tag = 'input window, operand 2, single buffered']
    #allocation5 [shape = 's32[1]{0}', space=sflag, size = 0x4, scoped, tag = 'scoped memory for gru_classifier_forward.1']
    #allocation6 [shape = 'u8[10240]{0}', space=vmem, size = 0x2800, scoped, tag = 'input window, operand 3, single buffered']
    %9 = vsyncpa [#allocation3], 0
    %10 = vsyncpa [#allocation5], 0
    // Predicated region
    $region2: #{gru_classifier_forward.1} parent=1 // pred_check
      _
    $region3: #{gru_classifier_forward.1} parent=1 // pred_check_branch
      %12 = sbr.rel (0) target = $region5
    $region4: #{gru_classifier_forward.1} parent=1 // pred_region
      %14 = vsyncadd [#allocation3], 0
      %s16 = sshll.u32 %s0, 4
      %s17 = int_to_ptr.hbm [resolvable:$true] %s16
      %s18 = sshll.u32 [#allocation2], 4
      %s19 = int_to_ptr.vmem [resolvable:$true] %s18
      %21 = dma.hbm_to_vmem [thread:$0]  %s17, 32, %s19, [#allocation3]
    $region5: #{gru_classifier_forward.1} parent=1 // pred_fallthru
      _
    // Predicated region
    $region6: #{gru_classifier_forward.1} parent=1 // pred_check
      _
    $region7: #{gru_classifier_forward.1} parent=1 // pred_check_branch
      %23 = sbr.rel (0) target = $region9
    $region8: #{gru_classifier_forward.1} parent=1 // pred_region
      _
    $region9: #{gru_classifier_forward.1} parent=1 // pred_fallthru
      _
    // Predicated region
    $region10: #{gru_classifier_forward.1} parent=1 // pred_check
      _
    $region11: #{gru_classifier_forward.1} parent=1 // pred_check_branch
      %25 = sbr.rel (0) target = $region13
    $region12: #{gru_classifier_forward.1} parent=1 // pred_region
      %27 = vsyncadd [#allocation5], 0
      %s28 = sshll.u32 %s2, 4
      %s29 = int_to_ptr.hbm [resolvable:$true] %s28
      %s30 = sshll.u32 [#allocation4], 4
      %s31 = int_to_ptr.vmem [resolvable:$true] %s30
      %36 = dma.hbm_to_vmem [thread:$0]  %s29, 448, %s31, [#allocation5], 64, 64, 4
    $region13: #{gru_classifier_forward.1} parent=1 // pred_fallthru
      _
    // Predicated region
    $region14: #{gru_classifier_forward.1} parent=1 // pred_check
      _
    $region15: #{gru_classifier_forward.1} parent=1 // pred_check_branch
      %38 = sbr.rel (0) target = $region17
    $region16: #{gru_classifier_forward.1} parent=1 // pred_region
      %40 = vsyncadd [#allocation5], 0
      %s41 = sshll.u32 %s3, 4
      %s42 = int_to_ptr.hbm [resolvable:$true] %s41
      %s43 = sshll.u32 [#allocation6], 4
      %s44 = int_to_ptr.vmem [resolvable:$true] %s43
      %49 = dma.hbm_to_vmem [thread:$0]  %s42, 320, %s44, [#allocation5], 64, 64, 4
    $region17: #{gru_classifier_forward.1} parent=1 // pred_fallthru
      _
    // Predicated region
    $region18: #{gru_classifier_forward.1} parent=1 // pred_check
      _
    $region19: #{gru_classifier_forward.1} parent=1 // pred_check_branch
      %51 = sbr.rel (0) target = $region21
    $region20: #{gru_classifier_forward.1} parent=1 // pred_region
      %53 = dma.done [#allocation3], 32
    $region21: #{gru_classifier_forward.1} parent=1 // pred_fallthru
      _
    // Predicated region
    $region22: #{gru_classifier_forward.1} parent=1 // pred_check
      _
    $region23: #{gru_classifier_forward.1} parent=1 // pred_check_branch
      %55 = sbr.rel (0) target = $region25
    $region24: #{gru_classifier_forward.1} parent=1 // pred_region
      %57 = dma.done [#allocation5], 448
    $region25: #{gru_classifier_forward.1} parent=1 // pred_fallthru
      _
    // Predicated region
    $region26: #{gru_classifier_forward.1} parent=1 // pred_check
      _
    $region27: #{gru_classifier_forward.1} parent=1 // pred_check_branch
      %59 = sbr.rel (0) target = $region29
    $region28: #{gru_classifier_forward.1} parent=1 // pred_region
      %61 = dma.done [#allocation5], 320
    $region29: #{gru_classifier_forward.1} parent=1 // pred_fallthru
      _
    %v63 = vld [vmem:[%s1] sm:$0x1]
    %v65 = vperm.slane %v63, 0
    %v67 = vld [vmem:[#allocation2] sm:$0x3]
    %v68 = vld [vmem:[#allocation4] sm:$0xf]
    %v69 = vld [vmem:[#allocation4 + $0x4] sm:$0xf]
    %v70 = vld [vmem:[#allocation4 + $0x8] sm:$0xf]
    %v71 = vld [vmem:[#allocation4 + $0xc] sm:$0xf]
    %v72 = vld [vmem:[#allocation4 + $0x10] sm:$0xf]
    %v73 = vld [vmem:[#allocation4 + $0x14] sm:$0xf]
    %v74 = vld [vmem:[#allocation4 + $0x18] sm:$0x1]
    %v75 = vld [vmem:[#allocation6] sm:$0xf]
    %v76 = vld [vmem:[#allocation6 + $0x4] sm:$0xf]
    %v77 = vld [vmem:[#allocation6 + $0x8] sm:$0xf]
    %v78 = vld [vmem:[#allocation6 + $0xc] sm:$0xf]
    %v79 = vld [vmem:[#allocation6 + $0x10] sm:$0x1]
    %80 = vrot.lane.b32.xlu0 %v65, 16
    %v81 = vpop.permute.xlu0 %80
    %vm83 = vcmask 130048
    %v84 = vsel %vm83, %v67, %v81
    %vm85 = vcmask 392192
    %v86 = vsel %vm85, %v84, 1.0
    %v87 = vpack.c.bf16 %v86, %v86
    %v95 = vunpack.c.l.b16 %v68
    %v96 = vunpack.c.l.b16 %v69
    %v97 = vunpack.c.l.b16 %v70
    %v98 = vunpack.c.l.b16 %v71
    %v99 = vunpack.c.l.b16 %v72
    %v100 = vunpack.c.l.b16 %v73
    %v101 = vunpack.c.l.b16 %v74
    %v102 = vpack.c.b16 %v96, %v95
    %v103 = vpack.c.b16 %v98, %v97
    %v104 = vpack.c.b16 %v100, %v99
    %v105 = vpack.c.b16 %v101, %v101
    %vm109 = vcmask 400384
    %v111 = vsel %vm109, %v87, 0
    %vm113 = vcmask 1040384
    %v114 = vsel 0, 4294967295, 65535
    %v115 = vsel %vm113, %v114, 0
    %v117 = vand.u32 %v105, %v115
    %119 = vmatpush.bf16.msra.mxu0 0
    %120 = vmatpush.bf16.msra.mxu0 0
    %121 = vmatpush.bf16.msra.mxu0 0
    %122 = vmatpush.bf16.msra.mxu0 0
    %123 = vmatpush.bf16.msra.mxu0 %v117
    %124 = vmatpush.bf16.msra.mxu0 %v104
    %125 = vmatpush.bf16.msra.mxu0 %v103
    %126 = vmatpush.bf16.msra.mxu0 %v102
    %127 = vmatmul.bf16.gmra.mxu0 %v111
    %v128 = vpop.f32.mrf.mxu0
    %v129 = vadd.f32 0.0, %v128
    %v130 = vpop.f32.mrf.mxu0
    %131 = vdwg.mxu0
    %v132 = vxor.u32 %v129, 2147483648
    %v133 = vmul.f32 %v132, 1.442695
    %v134 = vpow.pop %v133
    %v135 = vadd.f32 %v134, 1.0
    %v136 = vrcp.pop %v135
    %v137 = vmul.f32 %v135, %v136
    %v138 = vsub.f32 1.0, %v137
    %v139 = vmul.f32 %v136, %v138
    %v140 = vadd.f32 %v136, %v139
    %vm141 = vweird.f32 %v135
    %vm142 = vweird.f32 %v136
    %vm143 = vmor %vm141, %vm142
    %v144 = vsel %vm143, %v136, %v140
    %v145 = vand.u32 2147483647, %v135
    %vm146 = vcmp.eq.f32.partialorder %v145, 8.507059e+37
    %v147 = vand.u32 %v135, 2147483648
    %v148 = vor.u32 1.1754944e-38, %v147
    %v149 = vsel %vm146, %v148, %v144
    %v150 = vmul.f32 1.0, %v149
    %151 = vrot.lane.b32.xlu0 %v65, 32
    %v152 = vpop.permute.xlu0 %151
    %v154 = vmul.f32 %v150, %v152
    %156 = vrot.lane.b32.xlu0 %v154, 112
    %v157 = vpop.permute.xlu0 %156
    %v159 = vsel %vm83, %v67, %v157
    %v160 = vsel %vm85, %v159, 1.0
    %v161 = vpack.c.bf16 %v160, %v160
    %162 = vrot.lane.b32.xlu0 %v102, 64
    %v163 = vpop.permute.xlu0 %162
    %164 = vrot.lane.b32.xlu0 %v103, 64
    %v165 = vpop.permute.xlu0 %164
    %166 = vrot.lane.b32.xlu0 %v104, 64
    %v167 = vpop.permute.xlu0 %166
    %168 = vrot.lane.b32.xlu0 %v105, 64
    %v169 = vpop.permute.xlu0 %168
    %v174 = vsel %vm109, %v161, 0
    %v177 = vand.u32 %v169, %v115
    %179 = vmatpush.bf16.msra.mxu0 0
    %180 = vmatpush.bf16.msra.mxu0 0
    %181 = vmatpush.bf16.msra.mxu0 0
    %182 = vmatpush.bf16.msra.mxu0 0
    %183 = vmatpush.bf16.msra.mxu0 %v177
    %184 = vmatpush.bf16.msra.mxu0 %v167
    %185 = vmatpush.bf16.msra.mxu0 %v165
    %186 = vmatpush.bf16.msra.mxu0 %v163
    %187 = vmatmul.bf16.gmra.mxu0 %v174
    %v188 = vpop.f32.mrf.mxu0
    %v189 = vadd.f32 0.0, %v188
    %v190 = vpop.f32.mrf.mxu0
    %191 = vdwg.mxu0
    %v192 = vtanh.pop %v189
    %v193 = vmul.f32 %v150, %v65
    %v194 = vsub.f32 1.0, %v150
    %v195 = vmul.f32 %v194, %v192
    %v196 = vadd.f32 %v193, %v195
    %vm197 = vcmask 261120
    %v198 = vsel %vm197, %v196, 1.0
    %v199 = vpack.c.bf16 %v198, %v198
    %v205 = vunpack.c.l.b16 %v75
    %v206 = vunpack.c.l.b16 %v76
    %v207 = vunpack.c.l.b16 %v77
    %v208 = vunpack.c.l.b16 %v78
    %v209 = vunpack.c.l.b16 %v79
    %v210 = vpack.c.b16 %v206, %v205
    %v211 = vpack.c.b16 %v208, %v207
    %v212 = vpack.c.b16 %v209, %v209
    %vm215 = vcmask 269312
    %v217 = vsel %vm215, %v199, 0
    %v220 = vand.u32 %v212, %v115
    %222 = vmatpush.bf16.msra.mxu0 0
    %223 = vmatpush.bf16.msra.mxu0 0
    %224 = vmatpush.bf16.msra.mxu0 0
    %225 = vmatpush.bf16.msra.mxu0 0
    %226 = vmatpush.bf16.msra.mxu0 0
    %227 = vmatpush.bf16.msra.mxu0 %v220
    %228 = vmatpush.bf16.msra.mxu0 %v211
    %229 = vmatpush.bf16.msra.mxu0 %v210
    %230 = vmatmul.bf16.gmra.mxu0 %v217
    %v231 = vpop.f32.mrf.mxu0
    %v232 = vadd.f32 0.0, %v231
    %v233 = vpop.f32.mrf.mxu0
    %234 = vdwg.mxu0
    %236 = vrot.lane.b32.xlu0 %v232, 32
    %v237 = vpop.permute.xlu0 %236
    %v239 = vsel %vm197, %v196, %v237
    %240 = vst [vmem:[%s4] sm:$0x3] %v239
    // Predicated region
    $region30: #{gru_classifier_forward.1} parent=1 // pred_check
      _
    $region31: #{gru_classifier_forward.1} parent=1 // pred_check_branch
      %242 = sbr.rel (0) target = $region33
    $region32: #{gru_classifier_forward.1} parent=1 // pred_region
      _
    $region33: #{gru_classifier_forward.1} parent=1 // pred_fallthru
      _
    // Predicated region
    $region34: #{gru_classifier_forward.1} parent=1 // pred_check
      _
    $region35: #{gru_classifier_forward.1} parent=1 // pred_check_branch
      %244 = sbr.rel (0) target = $region37
    $region36: #{gru_classifier_forward.1} parent=1 // pred_region
      _
    $region37: #{gru_classifier_forward.1} parent=1 // pred_fallthru
      _
    %245 = vsyncpa [#allocation3], 1
    %246 = vsyncpa [#allocation5], 1

</llo_original>
